<compile_context>
chip_gen: v7x
topology: tpu7x:2x2x1
jax: 0.10.0
libtpu: 0.0.40
codegen_flags: <defaults>
</compile_context>

<pallas_src>
import jax
import jax.numpy as jnp
from jax import lax
from jax.experimental import pallas as pl
from jax.experimental.pallas import tpu as pltpu

LANE = 128
_CHUNK = 16     # sublane rows per inner iteration (2 vregs per feature slab)


def mlp_kernel(w0_ref, b0_ref, w1_ref, b1_ref, w2_ref, b2_ref, x_ref, o_ref):
    # x_ref: (8, sb, 128) f32 — feature-major block, batch folded onto (sublane, lane).
    # o_ref: (sb, 128) f32 — dense output slab.
    # Weights/biases are SMEM scalars -> pure VPU broadcast-FMAs, no MXU.
    sb = o_ref.shape[0]
    ch = _CHUNK if sb % _CHUNK == 0 else sb
    n_chunks = sb // ch

    def chunk(c, carry):
        r = pl.multiple_of(c * ch, ch)
        xs = [x_ref[i, pl.ds(r, ch), :] for i in range(8)]        # 8 x (ch, 128)

        # Layer 0: 8 -> 4, ReLU
        h0 = []
        for j in range(4):
            acc = xs[0] * w0_ref[0, j] + b0_ref[j]
            for i in range(1, 8):
                acc = acc + xs[i] * w0_ref[i, j]
            h0.append(jnp.maximum(acc, 0.0))

        # Layer 1: 4 -> 4, ReLU
        h1 = []
        for j in range(4):
            acc = h0[0] * w1_ref[0, j] + b1_ref[j]
            for i in range(1, 4):
                acc = acc + h0[i] * w1_ref[i, j]
            h1.append(jnp.maximum(acc, 0.0))

        # Layer 2: 4 -> 1, sigmoid (exact tanh form; transcendental on the EUP)
        z = h1[0] * w2_ref[0, 0] + b2_ref[0]
        for i in range(1, 4):
            z = z + h1[i] * w2_ref[i, 0]
        o_ref[pl.ds(r, ch), :] = 0.5 * jnp.tanh(0.5 * z) + 0.5
        return carry

    lax.fori_loop(0, n_chunks, chunk, 0)


def _pick_block_rows(rows: int, block_rows: int) -> int:
    """Sublane-rows per grid step: multiple of _CHUNK, and >=2 grid steps when possible."""
    if rows <= _CHUNK:
        return rows                                   # single tiny block, full extent
    half = (rows + 1) // 2                            # keep >= 2 steps for v7x megacore
    sb = max(_CHUNK, min(block_rows, half))
    return ((sb + _CHUNK - 1) // _CHUNK) * _CHUNK


def classifier_forward_feature_major(xt, params, *, block_rows=512):
    """Run the MLP on feature-major input xt: (8, rows, 128) f32.

    Returns (rows, 128) f32 sigmoid probabilities (batch folded onto (sublane, lane)).
    Zero-extra-HBM-pass entry point: producers that can emit feature-major data
    should call this directly.
    """
    w0, b0, w1, b1, w2, b2 = params
    rows = xt.shape[1]
    sb = _pick_block_rows(rows, block_rows)
    grid = (pl.cdiv(rows, sb),)

    n = rows * LANE
    cost = pl.CostEstimate(flops=117 * n, transcendentals=n, bytes_accessed=36 * n)

    smem = pl.BlockSpec(memory_space=pltpu.MemorySpace.SMEM)
    return pl.pallas_call(
        mlp_kernel,
        out_shape=jax.ShapeDtypeStruct((rows, LANE), jnp.float32),
        grid=grid,
        in_specs=[smem] * 6 + [pl.BlockSpec((8, sb, LANE), lambda i: (0, i, 0))],
        out_specs=pl.BlockSpec((sb, LANE), lambda i: (i, 0)),
        compiler_params=pltpu.CompilerParams(
            dimension_semantics=("parallel",),
            vmem_limit_bytes=32 * 1024 * 1024,
        ),
        cost_estimate=cost,
    )(w0, b0, w1, b1, w2, b2, xt)


def classifier_forward(x, params, *, block_rows=512):
    """x: (B, 8) float32 (PyTorch nn.Linear layout). Returns (B, 1) sigmoid probs."""
    B = x.shape[0]
    rows = pl.cdiv(B, LANE)
    b_pad = rows * LANE

    xp = x.astype(jnp.float32)
    if b_pad != B:                 # pad only when the batch isn't lane-aligned
        xp = jnp.pad(xp, ((0, b_pad - B), (0, 0)))
    # One fused relayout pass: (B, 8) batch-major -> (8, rows, 128) feature-major.
    # TODO(synk): producers that can emit feature-major data should call
    # classifier_forward_feature_major directly and skip this pass; an in-kernel
    # stride-8 lane de-interleave needs XLU shuffles Pallas can't express reliably.
    xt = xp.reshape(rows, LANE, 8).transpose(2, 0, 1)

    out = classifier_forward_feature_major(xt, params, block_rows=block_rows)
    return out.reshape(b_pad, 1)[:B]


def init_params(key):
    """Deterministic synthetic parameters matching Classifier_torch shapes.

    PyTorch: weight ~ uniform(0,1) via nn.init.uniform_; bias keeps the default
    uniform(-1/sqrt(fan_in), 1/sqrt(fan_in)). Weights stored transposed as (in, out).
    """
    k = jax.random.split(key, 6)
    w0 = jax.random.uniform(k[0], (8, 4), jnp.float32)                 # dense_00.weight.T
    b0 = jax.random.uniform(k[1], (4,), jnp.float32,
                            minval=-1.0 / jnp.sqrt(8.0), maxval=1.0 / jnp.sqrt(8.0))
    w1 = jax.random.uniform(k[2], (4, 4), jnp.float32)                 # dense_01.weight.T
    b1 = jax.random.uniform(k[3], (4,), jnp.float32, minval=-0.5, maxval=0.5)
    w2 = jax.random.uniform(k[4], (4, 1), jnp.float32)                 # dense_02.weight.T
    b2 = jax.random.uniform(k[5], (1,), jnp.float32, minval=-0.5, maxval=0.5)
    return (w0, b0, w1, b1, w2, b2)


def reference_forward(x, params):
    w0, b0, w1, b1, w2, b2 = params
    h0 = jnp.maximum(x @ w0 + b0, 0.0)
    h1 = jnp.maximum(h0 @ w1 + b1, 0.0)
    return jax.nn.sigmoid(h1 @ w2 + b2)


if __name__ == "__main__":
    key = jax.random.PRNGKey(0)
    kp, k1, k2, k3 = jax.random.split(key, 4)
    params = init_params(kp)

    # Tiny batch (module-native (B, 8) shape).
    x_small = jax.random.normal(k1, (8, 8), jnp.float32)
    out_small = jax.block_until_ready(classifier_forward(x_small, params))
    assert out_small.shape == (8, 1)
    assert jnp.allclose(out_small, reference_forward(x_small, params), atol=1e-5, rtol=1e-5)

    # Lane-aligned batch: no pad pass, default block sizing, 2 grid steps (megacore path).
    x_mid = jax.random.normal(k2, (4096, 8), jnp.float32)
    out_mid = jax.block_until_ready(classifier_forward(x_mid, params))
    assert out_mid.shape == (4096, 1)
    assert jnp.allclose(out_mid, reference_forward(x_mid, params), atol=1e-5, rtol=1e-5)

    # Ragged batch with a small block: exercises padding, a multi-step grid and the
    # partial (OOB-masked) trailing block.
    x_big = jax.random.normal(k3, (10000, 8), jnp.float32)
    out_big = jax.block_until_ready(classifier_forward(x_big, params, block_rows=32))
    assert out_big.shape == (10000, 1)
    assert jnp.allclose(out_big, reference_forward(x_big, params), atol=1e-5, rtol=1e-5)

    print("KERNEL_OK")
</pallas_src>

<mosaic_0001>
module attributes {stable_mosaic.version = 11 : i64} {
  func.func @mlp_kernel(%arg0: i32, %arg1: memref<8x4xf32, #tpu.memory_space<smem>>, %arg2: memref<4xf32, #tpu.memory_space<smem>>, %arg3: memref<4x4xf32, #tpu.memory_space<smem>>, %arg4: memref<4xf32, #tpu.memory_space<smem>>, %arg5: memref<4x1xf32, #tpu.memory_space<smem>>, %arg6: memref<1xf32, #tpu.memory_space<smem>>, %arg7: memref<8x1x128xf32, #tpu.memory_space<vmem>>, %arg8: memref<1x128xf32, #tpu.memory_space<vmem>>) attributes {dimension_semantics = [#tpu.dimension_semantics<parallel>], iteration_bounds = array<i64: 1>, scalar_prefetch = 0 : i64, scratch_operands = 0 : i64, tpu.core_type = #tpu.core_type<tc>, window_params = [{transform_indices = @transform_0, window_bounds = array<i64: 8, 4>}, {transform_indices = @transform_1, window_bounds = array<i64: 4>}, {transform_indices = @transform_2, window_bounds = array<i64: 4, 4>}, {transform_indices = @transform_3, window_bounds = array<i64: 4>}, {transform_indices = @transform_4, window_bounds = array<i64: 4, 1>}, {transform_indices = @transform_5, window_bounds = array<i64: 1>}, {transform_indices = @transform_6, window_bounds = array<i64: 8, 1, 128>}, {transform_indices = @transform_7, window_bounds = array<i64: 1, 128>}]} {
    %c0_i32 = arith.constant 0 : i32
    %c1_i32 = arith.constant 1 : i32
    %0 = arith.muli %c0_i32, %c1_i32 : i32
    %1 = tpu.assume_multiple %0, 1 : i32
    %c0 = arith.constant 0 : index
    %2 = arith.index_cast %1 : i32 to index
    %c0_0 = arith.constant 0 : index
    %3 = vector.load %arg7[%c0, %2, %c0_0] : memref<8x1x128xf32, #tpu.memory_space<vmem>>, vector<1x1x128xf32>
    %4 = vector.shape_cast %3 : vector<1x1x128xf32> to vector<1x128xf32>
    %c1 = arith.constant 1 : index
    %5 = arith.index_cast %1 : i32 to index
    %c0_1 = arith.constant 0 : index
    %6 = vector.load %arg7[%c1, %5, %c0_1] : memref<8x1x128xf32, #tpu.memory_space<vmem>>, vector<1x1x128xf32>
    %7 = vector.shape_cast %6 : vector<1x1x128xf32> to vector<1x128xf32>
    %c2 = arith.constant 2 : index
    %8 = arith.index_cast %1 : i32 to index
    %c0_2 = arith.constant 0 : index
    %9 = vector.load %arg7[%c2, %8, %c0_2] : memref<8x1x128xf32, #tpu.memory_space<vmem>>, vector<1x1x128xf32>
    %10 = vector.shape_cast %9 : vector<1x1x128xf32> to vector<1x128xf32>
    %c3 = arith.constant 3 : index
    %11 = arith.index_cast %1 : i32 to index
    %c0_3 = arith.constant 0 : index
    %12 = vector.load %arg7[%c3, %11, %c0_3] : memref<8x1x128xf32, #tpu.memory_space<vmem>>, vector<1x1x128xf32>
    %13 = vector.shape_cast %12 : vector<1x1x128xf32> to vector<1x128xf32>
    %c4 = arith.constant 4 : index
    %14 = arith.index_cast %1 : i32 to index
    %c0_4 = arith.constant 0 : index
    %15 = vector.load %arg7[%c4, %14, %c0_4] : memref<8x1x128xf32, #tpu.memory_space<vmem>>, vector<1x1x128xf32>
    %16 = vector.shape_cast %15 : vector<1x1x128xf32> to vector<1x128xf32>
    %c5 = arith.constant 5 : index
    %17 = arith.index_cast %1 : i32 to index
    %c0_5 = arith.constant 0 : index
    %18 = vector.load %arg7[%c5, %17, %c0_5] : memref<8x1x128xf32, #tpu.memory_space<vmem>>, vector<1x1x128xf32>
    %19 = vector.shape_cast %18 : vector<1x1x128xf32> to vector<1x128xf32>
    %c6 = arith.constant 6 : index
    %20 = arith.index_cast %1 : i32 to index
    %c0_6 = arith.constant 0 : index
    %21 = vector.load %arg7[%c6, %20, %c0_6] : memref<8x1x128xf32, #tpu.memory_space<vmem>>, vector<1x1x128xf32>
    %22 = vector.shape_cast %21 : vector<1x1x128xf32> to vector<1x128xf32>
    %c7 = arith.constant 7 : index
    %23 = arith.index_cast %1 : i32 to index
    %c0_7 = arith.constant 0 : index
    %24 = vector.load %arg7[%c7, %23, %c0_7] : memref<8x1x128xf32, #tpu.memory_space<vmem>>, vector<1x1x128xf32>
    %25 = vector.shape_cast %24 : vector<1x1x128xf32> to vector<1x128xf32>
    %c0_8 = arith.constant 0 : index
    %c0_9 = arith.constant 0 : index
    %26 = memref.load %arg1[%c0_8, %c0_9] : memref<8x4xf32, #tpu.memory_space<smem>>
    %27 = vector.broadcast %26 : f32 to vector<1x128xf32>
    %28 = arith.mulf %4, %27 : vector<1x128xf32>
    %c0_10 = arith.constant 0 : index
    %29 = memref.load %arg2[%c0_10] : memref<4xf32, #tpu.memory_space<smem>>
    %30 = vector.broadcast %29 : f32 to vector<1x128xf32>
    %31 = arith.addf %28, %30 : vector<1x128xf32>
    %c1_11 = arith.constant 1 : index
    %c0_12 = arith.constant 0 : index
    %32 = memref.load %arg1[%c1_11, %c0_12] : memref<8x4xf32, #tpu.memory_space<smem>>
    %33 = vector.broadcast %32 : f32 to vector<1x128xf32>
    %34 = arith.mulf %7, %33 : vector<1x128xf32>
    %35 = arith.addf %31, %34 : vector<1x128xf32>
    %c2_13 = arith.constant 2 : index
    %c0_14 = arith.constant 0 : index
    %36 = memref.load %arg1[%c2_13, %c0_14] : memref<8x4xf32, #tpu.memory_space<smem>>
    %37 = vector.broadcast %36 : f32 to vector<1x128xf32>
    %38 = arith.mulf %10, %37 : vector<1x128xf32>
    %39 = arith.addf %35, %38 : vector<1x128xf32>
    %c3_15 = arith.constant 3 : index
    %c0_16 = arith.constant 0 : index
    %40 = memref.load %arg1[%c3_15, %c0_16] : memref<8x4xf32, #tpu.memory_space<smem>>
    %41 = vector.broadcast %40 : f32 to vector<1x128xf32>
    %42 = arith.mulf %13, %41 : vector<1x128xf32>
    %43 = arith.addf %39, %42 : vector<1x128xf32>
    %c4_17 = arith.constant 4 : index
    %c0_18 = arith.constant 0 : index
    %44 = memref.load %arg1[%c4_17, %c0_18] : memref<8x4xf32, #tpu.memory_space<smem>>
    %45 = vector.broadcast %44 : f32 to vector<1x128xf32>
    %46 = arith.mulf %16, %45 : vector<1x128xf32>
    %47 = arith.addf %43, %46 : vector<1x128xf32>
    %c5_19 = arith.constant 5 : index
    %c0_20 = arith.constant 0 : index
    %48 = memref.load %arg1[%c5_19, %c0_20] : memref<8x4xf32, #tpu.memory_space<smem>>
    %49 = vector.broadcast %48 : f32 to vector<1x128xf32>
    %50 = arith.mulf %19, %49 : vector<1x128xf32>
    %51 = arith.addf %47, %50 : vector<1x128xf32>
    %c6_21 = arith.constant 6 : index
    %c0_22 = arith.constant 0 : index
    %52 = memref.load %arg1[%c6_21, %c0_22] : memref<8x4xf32, #tpu.memory_space<smem>>
    %53 = vector.broadcast %52 : f32 to vector<1x128xf32>
    %54 = arith.mulf %22, %53 : vector<1x128xf32>
    %55 = arith.addf %51, %54 : vector<1x128xf32>
    %c7_23 = arith.constant 7 : index
    %c0_24 = arith.constant 0 : index
    %56 = memref.load %arg1[%c7_23, %c0_24] : memref<8x4xf32, #tpu.memory_space<smem>>
    %57 = vector.broadcast %56 : f32 to vector<1x128xf32>
    %58 = arith.mulf %25, %57 : vector<1x128xf32>
    %59 = arith.addf %55, %58 : vector<1x128xf32>
    %cst = arith.constant 0.000000e+00 : f32
    %60 = vector.broadcast %cst : f32 to vector<1x128xf32>
    %61 = arith.maximumf %59, %60 : vector<1x128xf32>
    %c0_25 = arith.constant 0 : index
    %c1_26 = arith.constant 1 : index
    %62 = memref.load %arg1[%c0_25, %c1_26] : memref<8x4xf32, #tpu.memory_space<smem>>
    %63 = vector.broadcast %62 : f32 to vector<1x128xf32>
    %64 = arith.mulf %4, %63 : vector<1x128xf32>
    %c1_27 = arith.constant 1 : index
    %65 = memref.load %arg2[%c1_27] : memref<4xf32, #tpu.memory_space<smem>>
    %66 = vector.broadcast %65 : f32 to vector<1x128xf32>
    %67 = arith.addf %64, %66 : vector<1x128xf32>
    %c1_28 = arith.constant 1 : index
    %c1_29 = arith.constant 1 : index
    %68 = memref.load %arg1[%c1_28, %c1_29] : memref<8x4xf32, #tpu.memory_space<smem>>
    %69 = vector.broadcast %68 : f32 to vector<1x128xf32>
    %70 = arith.mulf %7, %69 : vector<1x128xf32>
    %71 = arith.addf %67, %70 : vector<1x128xf32>
    %c2_30 = arith.constant 2 : index
    %c1_31 = arith.constant 1 : index
    %72 = memref.load %arg1[%c2_30, %c1_31] : memref<8x4xf32, #tpu.memory_space<smem>>
    %73 = vector.broadcast %72 : f32 to vector<1x128xf32>
    %74 = arith.mulf %10, %73 : vector<1x128xf32>
    %75 = arith.addf %71, %74 : vector<1x128xf32>
    %c3_32 = arith.constant 3 : index
    %c1_33 = arith.constant 1 : index
    %76 = memref.load %arg1[%c3_32, %c1_33] : memref<8x4xf32, #tpu.memory_space<smem>>
    %77 = vector.broadcast %76 : f32 to vector<1x128xf32>
    %78 = arith.mulf %13, %77 : vector<1x128xf32>
    %79 = arith.addf %75, %78 : vector<1x128xf32>
    %c4_34 = arith.constant 4 : index
    %c1_35 = arith.constant 1 : index
    %80 = memref.load %arg1[%c4_34, %c1_35] : memref<8x4xf32, #tpu.memory_space<smem>>
    %81 = vector.broadcast %80 : f32 to vector<1x128xf32>
    %82 = arith.mulf %16, %81 : vector<1x128xf32>
    %83 = arith.addf %79, %82 : vector<1x128xf32>
    %c5_36 = arith.constant 5 : index
    %c1_37 = arith.constant 1 : index
    %84 = memref.load %arg1[%c5_36, %c1_37] : memref<8x4xf32, #tpu.memory_space<smem>>
    %85 = vector.broadcast %84 : f32 to vector<1x128xf32>
    %86 = arith.mulf %19, %85 : vector<1x128xf32>
    %87 = arith.addf %83, %86 : vector<1x128xf32>
    %c6_38 = arith.constant 6 : index
    %c1_39 = arith.constant 1 : index
    %88 = memref.load %arg1[%c6_38, %c1_39] : memref<8x4xf32, #tpu.memory_space<smem>>
    %89 = vector.broadcast %88 : f32 to vector<1x128xf32>
    %90 = arith.mulf %22, %89 : vector<1x128xf32>
    %91 = arith.addf %87, %90 : vector<1x128xf32>
    %c7_40 = arith.constant 7 : index
    %c1_41 = arith.constant 1 : index
    %92 = memref.load %arg1[%c7_40, %c1_41] : memref<8x4xf32, #tpu.memory_space<smem>>
    %93 = vector.broadcast %92 : f32 to vector<1x128xf32>
    %94 = arith.mulf %25, %93 : vector<1x128xf32>
    %95 = arith.addf %91, %94 : vector<1x128xf32>
    %cst_42 = arith.constant 0.000000e+00 : f32
    %96 = vector.broadcast %cst_42 : f32 to vector<1x128xf32>
    %97 = arith.maximumf %95, %96 : vector<1x128xf32>
    %c0_43 = arith.constant 0 : index
    %c2_44 = arith.constant 2 : index
    %98 = memref.load %arg1[%c0_43, %c2_44] : memref<8x4xf32, #tpu.memory_space<smem>>
    %99 = vector.broadcast %98 : f32 to vector<1x128xf32>
    %100 = arith.mulf %4, %99 : vector<1x128xf32>
    %c2_45 = arith.constant 2 : index
    %101 = memref.load %arg2[%c2_45] : memref<4xf32, #tpu.memory_space<smem>>
    %102 = vector.broadcast %101 : f32 to vector<1x128xf32>
    %103 = arith.addf %100, %102 : vector<1x128xf32>
    %c1_46 = arith.constant 1 : index
    %c2_47 = arith.constant 2 : index
    %104 = memref.load %arg1[%c1_46, %c2_47] : memref<8x4xf32, #tpu.memory_space<smem>>
    %105 = vector.broadcast %104 : f32 to vector<1x128xf32>
    %106 = arith.mulf %7, %105 : vector<1x128xf32>
    %107 = arith.addf %103, %106 : vector<1x128xf32>
    %c2_48 = arith.constant 2 : index
    %c2_49 = arith.constant 2 : index
    %108 = memref.load %arg1[%c2_48, %c2_49] : memref<8x4xf32, #tpu.memory_space<smem>>
    %109 = vector.broadcast %108 : f32 to vector<1x128xf32>
    %110 = arith.mulf %10, %109 : vector<1x128xf32>
    %111 = arith.addf %107, %110 : vector<1x128xf32>
    %c3_50 = arith.constant 3 : index
    %c2_51 = arith.constant 2 : index
    %112 = memref.load %arg1[%c3_50, %c2_51] : memref<8x4xf32, #tpu.memory_space<smem>>
    %113 = vector.broadcast %112 : f32 to vector<1x128xf32>
    %114 = arith.mulf %13, %113 : vector<1x128xf32>
    %115 = arith.addf %111, %114 : vector<1x128xf32>
    %c4_52 = arith.constant 4 : index
    %c2_53 = arith.constant 2 : index
    %116 = memref.load %arg1[%c4_52, %c2_53] : memref<8x4xf32, #tpu.memory_space<smem>>
    %117 = vector.broadcast %116 : f32 to vector<1x128xf32>
    %118 = arith.mulf %16, %117 : vector<1x128xf32>
    %119 = arith.addf %115, %118 : vector<1x128xf32>
    %c5_54 = arith.constant 5 : index
    %c2_55 = arith.constant 2 : index
    %120 = memref.load %arg1[%c5_54, %c2_55] : memref<8x4xf32, #tpu.memory_space<smem>>
    %121 = vector.broadcast %120 : f32 to vector<1x128xf32>
    %122 = arith.mulf %19, %121 : vector<1x128xf32>
    %123 = arith.addf %119, %122 : vector<1x128xf32>
    %c6_56 = arith.constant 6 : index
    %c2_57 = arith.constant 2 : index
    %124 = memref.load %arg1[%c6_56, %c2_57] : memref<8x4xf32, #tpu.memory_space<smem>>
    %125 = vector.broadcast %124 : f32 to vector<1x128xf32>
    %126 = arith.mulf %22, %125 : vector<1x128xf32>
    %127 = arith.addf %123, %126 : vector<1x128xf32>
    %c7_58 = arith.constant 7 : index
    %c2_59 = arith.constant 2 : index
    %128 = memref.load %arg1[%c7_58, %c2_59] : memref<8x4xf32, #tpu.memory_space<smem>>
    %129 = vector.broadcast %128 : f32 to vector<1x128xf32>
    %130 = arith.mulf %25, %129 : vector<1x128xf32>
    %131 = arith.addf %127, %130 : vector<1x128xf32>
    %cst_60 = arith.constant 0.000000e+00 : f32
    %132 = vector.broadcast %cst_60 : f32 to vector<1x128xf32>
    %133 = arith.maximumf %131, %132 : vector<1x128xf32>
    %c0_61 = arith.constant 0 : index
    %c3_62 = arith.constant 3 : index
    %134 = memref.load %arg1[%c0_61, %c3_62] : memref<8x4xf32, #tpu.memory_space<smem>>
    %135 = vector.broadcast %134 : f32 to vector<1x128xf32>
    %136 = arith.mulf %4, %135 : vector<1x128xf32>
    %c3_63 = arith.constant 3 : index
    %137 = memref.load %arg2[%c3_63] : memref<4xf32, #tpu.memory_space<smem>>
    %138 = vector.broadcast %137 : f32 to vector<1x128xf32>
    %139 = arith.addf %136, %138 : vector<1x128xf32>
    %c1_64 = arith.constant 1 : index
    %c3_65 = arith.constant 3 : index
    %140 = memref.load %arg1[%c1_64, %c3_65] : memref<8x4xf32, #tpu.memory_space<smem>>
    %141 = vector.broadcast %140 : f32 to vector<1x128xf32>
    %142 = arith.mulf %7, %141 : vector<1x128xf32>
    %143 = arith.addf %139, %142 : vector<1x128xf32>
    %c2_66 = arith.constant 2 : index
    %c3_67 = arith.constant 3 : index
    %144 = memref.load %arg1[%c2_66, %c3_67] : memref<8x4xf32, #tpu.memory_space<smem>>
    %145 = vector.broadcast %144 : f32 to vector<1x128xf32>
    %146 = arith.mulf %10, %145 : vector<1x128xf32>
    %147 = arith.addf %143, %146 : vector<1x128xf32>
    %c3_68 = arith.constant 3 : index
    %c3_69 = arith.constant 3 : index
    %148 = memref.load %arg1[%c3_68, %c3_69] : memref<8x4xf32, #tpu.memory_space<smem>>
    %149 = vector.broadcast %148 : f32 to vector<1x128xf32>
    %150 = arith.mulf %13, %149 : vector<1x128xf32>
    %151 = arith.addf %147, %150 : vector<1x128xf32>
    %c4_70 = arith.constant 4 : index
    %c3_71 = arith.constant 3 : index
    %152 = memref.load %arg1[%c4_70, %c3_71] : memref<8x4xf32, #tpu.memory_space<smem>>
    %153 = vector.broadcast %152 : f32 to vector<1x128xf32>
    %154 = arith.mulf %16, %153 : vector<1x128xf32>
    %155 = arith.addf %151, %154 : vector<1x128xf32>
    %c5_72 = arith.constant 5 : index
    %c3_73 = arith.constant 3 : index
    %156 = memref.load %arg1[%c5_72, %c3_73] : memref<8x4xf32, #tpu.memory_space<smem>>
    %157 = vector.broadcast %156 : f32 to vector<1x128xf32>
    %158 = arith.mulf %19, %157 : vector<1x128xf32>
    %159 = arith.addf %155, %158 : vector<1x128xf32>
    %c6_74 = arith.constant 6 : index
    %c3_75 = arith.constant 3 : index
    %160 = memref.load %arg1[%c6_74, %c3_75] : memref<8x4xf32, #tpu.memory_space<smem>>
    %161 = vector.broadcast %160 : f32 to vector<1x128xf32>
    %162 = arith.mulf %22, %161 : vector<1x128xf32>
    %163 = arith.addf %159, %162 : vector<1x128xf32>
    %c7_76 = arith.constant 7 : index
    %c3_77 = arith.constant 3 : index
    %164 = memref.load %arg1[%c7_76, %c3_77] : memref<8x4xf32, #tpu.memory_space<smem>>
    %165 = vector.broadcast %164 : f32 to vector<1x128xf32>
    %166 = arith.mulf %25, %165 : vector<1x128xf32>
    %167 = arith.addf %163, %166 : vector<1x128xf32>
    %cst_78 = arith.constant 0.000000e+00 : f32
    %168 = vector.broadcast %cst_78 : f32 to vector<1x128xf32>
    %169 = arith.maximumf %167, %168 : vector<1x128xf32>
    %c0_79 = arith.constant 0 : index
    %c0_80 = arith.constant 0 : index
    %170 = memref.load %arg3[%c0_79, %c0_80] : memref<4x4xf32, #tpu.memory_space<smem>>
    %171 = vector.broadcast %170 : f32 to vector<1x128xf32>
    %172 = arith.mulf %61, %171 : vector<1x128xf32>
    %c0_81 = arith.constant 0 : index
    %173 = memref.load %arg4[%c0_81] : memref<4xf32, #tpu.memory_space<smem>>
    %174 = vector.broadcast %173 : f32 to vector<1x128xf32>
    %175 = arith.addf %172, %174 : vector<1x128xf32>
    %c1_82 = arith.constant 1 : index
    %c0_83 = arith.constant 0 : index
    %176 = memref.load %arg3[%c1_82, %c0_83] : memref<4x4xf32, #tpu.memory_space<smem>>
    %177 = vector.broadcast %176 : f32 to vector<1x128xf32>
    %178 = arith.mulf %97, %177 : vector<1x128xf32>
    %179 = arith.addf %175, %178 : vector<1x128xf32>
    %c2_84 = arith.constant 2 : index
    %c0_85 = arith.constant 0 : index
    %180 = memref.load %arg3[%c2_84, %c0_85] : memref<4x4xf32, #tpu.memory_space<smem>>
    %181 = vector.broadcast %180 : f32 to vector<1x128xf32>
    %182 = arith.mulf %133, %181 : vector<1x128xf32>
    %183 = arith.addf %179, %182 : vector<1x128xf32>
    %c3_86 = arith.constant 3 : index
    %c0_87 = arith.constant 0 : index
    %184 = memref.load %arg3[%c3_86, %c0_87] : memref<4x4xf32, #tpu.memory_space<smem>>
    %185 = vector.broadcast %184 : f32 to vector<1x128xf32>
    %186 = arith.mulf %169, %185 : vector<1x128xf32>
    %187 = arith.addf %183, %186 : vector<1x128xf32>
    %cst_88 = arith.constant 0.000000e+00 : f32
    %188 = vector.broadcast %cst_88 : f32 to vector<1x128xf32>
    %189 = arith.maximumf %187, %188 : vector<1x128xf32>
    %c0_89 = arith.constant 0 : index
    %c1_90 = arith.constant 1 : index
    %190 = memref.load %arg3[%c0_89, %c1_90] : memref<4x4xf32, #tpu.memory_space<smem>>
    %191 = vector.broadcast %190 : f32 to vector<1x128xf32>
    %192 = arith.mulf %61, %191 : vector<1x128xf32>
    %c1_91 = arith.constant 1 : index
    %193 = memref.load %arg4[%c1_91] : memref<4xf32, #tpu.memory_space<smem>>
    %194 = vector.broadcast %193 : f32 to vector<1x128xf32>
    %195 = arith.addf %192, %194 : vector<1x128xf32>
    %c1_92 = arith.constant 1 : index
    %c1_93 = arith.constant 1 : index
    %196 = memref.load %arg3[%c1_92, %c1_93] : memref<4x4xf32, #tpu.memory_space<smem>>
    %197 = vector.broadcast %196 : f32 to vector<1x128xf32>
    %198 = arith.mulf %97, %197 : vector<1x128xf32>
    %199 = arith.addf %195, %198 : vector<1x128xf32>
    %c2_94 = arith.constant 2 : index
    %c1_95 = arith.constant 1 : index
    %200 = memref.load %arg3[%c2_94, %c1_95] : memref<4x4xf32, #tpu.memory_space<smem>>
    %201 = vector.broadcast %200 : f32 to vector<1x128xf32>
    %202 = arith.mulf %133, %201 : vector<1x128xf32>
    %203 = arith.addf %199, %202 : vector<1x128xf32>
    %c3_96 = arith.constant 3 : index
    %c1_97 = arith.constant 1 : index
    %204 = memref.load %arg3[%c3_96, %c1_97] : memref<4x4xf32, #tpu.memory_space<smem>>
    %205 = vector.broadcast %204 : f32 to vector<1x128xf32>
    %206 = arith.mulf %169, %205 : vector<1x128xf32>
    %207 = arith.addf %203, %206 : vector<1x128xf32>
    %cst_98 = arith.constant 0.000000e+00 : f32
    %208 = vector.broadcast %cst_98 : f32 to vector<1x128xf32>
    %209 = arith.maximumf %207, %208 : vector<1x128xf32>
    %c0_99 = arith.constant 0 : index
    %c2_100 = arith.constant 2 : index
    %210 = memref.load %arg3[%c0_99, %c2_100] : memref<4x4xf32, #tpu.memory_space<smem>>
    %211 = vector.broadcast %210 : f32 to vector<1x128xf32>
    %212 = arith.mulf %61, %211 : vector<1x128xf32>
    %c2_101 = arith.constant 2 : index
    %213 = memref.load %arg4[%c2_101] : memref<4xf32, #tpu.memory_space<smem>>
    %214 = vector.broadcast %213 : f32 to vector<1x128xf32>
    %215 = arith.addf %212, %214 : vector<1x128xf32>
    %c1_102 = arith.constant 1 : index
    %c2_103 = arith.constant 2 : index
    %216 = memref.load %arg3[%c1_102, %c2_103] : memref<4x4xf32, #tpu.memory_space<smem>>
    %217 = vector.broadcast %216 : f32 to vector<1x128xf32>
    %218 = arith.mulf %97, %217 : vector<1x128xf32>
    %219 = arith.addf %215, %218 : vector<1x128xf32>
    %c2_104 = arith.constant 2 : index
    %c2_105 = arith.constant 2 : index
    %220 = memref.load %arg3[%c2_104, %c2_105] : memref<4x4xf32, #tpu.memory_space<smem>>
    %221 = vector.broadcast %220 : f32 to vector<1x128xf32>
    %222 = arith.mulf %133, %221 : vector<1x128xf32>
    %223 = arith.addf %219, %222 : vector<1x128xf32>
    %c3_106 = arith.constant 3 : index
    %c2_107 = arith.constant 2 : index
    %224 = memref.load %arg3[%c3_106, %c2_107] : memref<4x4xf32, #tpu.memory_space<smem>>
    %225 = vector.broadcast %224 : f32 to vector<1x128xf32>
    %226 = arith.mulf %169, %225 : vector<1x128xf32>
    %227 = arith.addf %223, %226 : vector<1x128xf32>
    %cst_108 = arith.constant 0.000000e+00 : f32
    %228 = vector.broadcast %cst_108 : f32 to vector<1x128xf32>
    %229 = arith.maximumf %227, %228 : vector<1x128xf32>
    %c0_109 = arith.constant 0 : index
    %c3_110 = arith.constant 3 : index
    %230 = memref.load %arg3[%c0_109, %c3_110] : memref<4x4xf32, #tpu.memory_space<smem>>
    %231 = vector.broadcast %230 : f32 to vector<1x128xf32>
    %232 = arith.mulf %61, %231 : vector<1x128xf32>
    %c3_111 = arith.constant 3 : index
    %233 = memref.load %arg4[%c3_111] : memref<4xf32, #tpu.memory_space<smem>>
    %234 = vector.broadcast %233 : f32 to vector<1x128xf32>
    %235 = arith.addf %232, %234 : vector<1x128xf32>
    %c1_112 = arith.constant 1 : index
    %c3_113 = arith.constant 3 : index
    %236 = memref.load %arg3[%c1_112, %c3_113] : memref<4x4xf32, #tpu.memory_space<smem>>
    %237 = vector.broadcast %236 : f32 to vector<1x128xf32>
    %238 = arith.mulf %97, %237 : vector<1x128xf32>
    %239 = arith.addf %235, %238 : vector<1x128xf32>
    %c2_114 = arith.constant 2 : index
    %c3_115 = arith.constant 3 : index
    %240 = memref.load %arg3[%c2_114, %c3_115] : memref<4x4xf32, #tpu.memory_space<smem>>
    %241 = vector.broadcast %240 : f32 to vector<1x128xf32>
    %242 = arith.mulf %133, %241 : vector<1x128xf32>
    %243 = arith.addf %239, %242 : vector<1x128xf32>
    %c3_116 = arith.constant 3 : index
    %c3_117 = arith.constant 3 : index
    %244 = memref.load %arg3[%c3_116, %c3_117] : memref<4x4xf32, #tpu.memory_space<smem>>
    %245 = vector.broadcast %244 : f32 to vector<1x128xf32>
    %246 = arith.mulf %169, %245 : vector<1x128xf32>
    %247 = arith.addf %243, %246 : vector<1x128xf32>
    %cst_118 = arith.constant 0.000000e+00 : f32
    %248 = vector.broadcast %cst_118 : f32 to vector<1x128xf32>
    %249 = arith.maximumf %247, %248 : vector<1x128xf32>
    %c0_119 = arith.constant 0 : index
    %c0_120 = arith.constant 0 : index
    %250 = memref.load %arg5[%c0_119, %c0_120] : memref<4x1xf32, #tpu.memory_space<smem>>
    %251 = vector.broadcast %250 : f32 to vector<1x128xf32>
    %252 = arith.mulf %189, %251 : vector<1x128xf32>
    %c0_121 = arith.constant 0 : index
    %253 = memref.load %arg6[%c0_121] : memref<1xf32, #tpu.memory_space<smem>>
    %254 = vector.broadcast %253 : f32 to vector<1x128xf32>
    %255 = arith.addf %252, %254 : vector<1x128xf32>
    %c1_122 = arith.constant 1 : index
    %c0_123 = arith.constant 0 : index
    %256 = memref.load %arg5[%c1_122, %c0_123] : memref<4x1xf32, #tpu.memory_space<smem>>
    %257 = vector.broadcast %256 : f32 to vector<1x128xf32>
    %258 = arith.mulf %209, %257 : vector<1x128xf32>
    %259 = arith.addf %255, %258 : vector<1x128xf32>
    %c2_124 = arith.constant 2 : index
    %c0_125 = arith.constant 0 : index
    %260 = memref.load %arg5[%c2_124, %c0_125] : memref<4x1xf32, #tpu.memory_space<smem>>
    %261 = vector.broadcast %260 : f32 to vector<1x128xf32>
    %262 = arith.mulf %229, %261 : vector<1x128xf32>
    %263 = arith.addf %259, %262 : vector<1x128xf32>
    %c3_126 = arith.constant 3 : index
    %c0_127 = arith.constant 0 : index
    %264 = memref.load %arg5[%c3_126, %c0_127] : memref<4x1xf32, #tpu.memory_space<smem>>
    %265 = vector.broadcast %264 : f32 to vector<1x128xf32>
    %266 = arith.mulf %249, %265 : vector<1x128xf32>
    %267 = arith.addf %263, %266 : vector<1x128xf32>
    %cst_128 = arith.constant 5.000000e-01 : f32
    %268 = vector.broadcast %cst_128 : f32 to vector<1x128xf32>
    %269 = arith.mulf %268, %267 : vector<1x128xf32>
    %270 = math.tanh %269 : vector<1x128xf32>
    %cst_129 = arith.constant 5.000000e-01 : f32
    %271 = vector.broadcast %cst_129 : f32 to vector<1x128xf32>
    %272 = arith.mulf %271, %270 : vector<1x128xf32>
    %cst_130 = arith.constant 5.000000e-01 : f32
    %273 = vector.broadcast %cst_130 : f32 to vector<1x128xf32>
    %274 = arith.addf %272, %273 : vector<1x128xf32>
    %275 = arith.index_cast %1 : i32 to index
    %c0_131 = arith.constant 0 : index
    %276 = vector.load %arg8[%275, %c0_131] : memref<1x128xf32, #tpu.memory_space<vmem>>, vector<1x128xf32>
    tpu.vector_store %arg8[%275, %c0_131], %274 {strides = array<i32>} : memref<1x128xf32, #tpu.memory_space<vmem>>, vector<1x128xf32>,
    %c1_i32_132 = arith.constant 1 : i32
    return
  }
  func.func @transform_0(%arg0: i32) -> (i32, i32) {
    %c0_i32 = arith.constant 0 : i32
    %c0_i32_0 = arith.constant 0 : i32
    %c0_i32_1 = arith.constant 0 : i32
    return %c0_i32, %c0_i32_0 : i32, i32
  }
  func.func @transform_1(%arg0: i32) -> i32 {
    %c0_i32 = arith.constant 0 : i32
    %c0_i32_0 = arith.constant 0 : i32
    return %c0_i32 : i32
  }
  func.func @transform_2(%arg0: i32) -> (i32, i32) {
    %c0_i32 = arith.constant 0 : i32
    %c0_i32_0 = arith.constant 0 : i32
    %c0_i32_1 = arith.constant 0 : i32
    return %c0_i32, %c0_i32_0 : i32, i32
  }
  func.func @transform_3(%arg0: i32) -> i32 {
    %c0_i32 = arith.constant 0 : i32
    %c0_i32_0 = arith.constant 0 : i32
    return %c0_i32 : i32
  }
  func.func @transform_4(%arg0: i32) -> (i32, i32) {
    %c0_i32 = arith.constant 0 : i32
    %c0_i32_0 = arith.constant 0 : i32
    %c0_i32_1 = arith.constant 0 : i32
    return %c0_i32, %c0_i32_0 : i32, i32
  }
  func.func @transform_5(%arg0: i32) -> i32 {
    %c0_i32 = arith.constant 0 : i32
    %c0_i32_0 = arith.constant 0 : i32
    return %c0_i32 : i32
  }
  func.func @transform_6(%arg0: i32) -> (i32, i32, i32) {
    %c0_i32 = arith.constant 0 : i32
    %c0_i32_0 = arith.constant 0 : i32
    %c0_i32_1 = arith.constant 0 : i32
    return %c0_i32, %arg0, %c0_i32_0 : i32, i32, i32
  }
  func.func @transform_7(%arg0: i32) -> (i32, i32) {
    %c0_i32 = arith.constant 0 : i32
    %c0_i32_0 = arith.constant 0 : i32
    return %arg0, %c0_i32 : i32, i32
  }
}

</mosaic_0001>

<llo_original>
// kernel: tpu_custom_call.1
$region0: #{tpu_custom_call.1}
  #allocation0 [shape = 'u32[]', space=smem, size = 0x4, offset = 0x4, fixed_abs, tag = 'smem constant byte address 0x4 - core index']
  #allocation1 [shape = 'u32[144,128]{1,0:T(1,128)}', space=vmem, size = 0x12000, scoped, tag = 'internal scratch']
  #allocation2 [shape = 'f32[1]{0:T(128)S(6)}', space=smem, size = 0x200, scoped, tag = 'scoped memory for tpu_custom_call.1']
  %s0 = inlined_call_operand.vmem [shape: f32[8,4], index: 0, kind: input, shape index: {}]
  %s1 = inlined_call_operand.vmem [shape: f32[4], index: 1, kind: input, shape index: {}]
  %s2 = inlined_call_operand.vmem [shape: f32[4,4], index: 2, kind: input, shape index: {}]
  %s3 = inlined_call_operand.vmem [shape: f32[4], index: 3, kind: input, shape index: {}]
  %s4 = inlined_call_operand.vmem [shape: f32[4,1], index: 4, kind: input, shape index: {}]
  %s5 = inlined_call_operand.<no memory space> [shape: f32[1], index: 5, kind: input, shape index: {}]
  %s6 = inlined_call_operand.vmem [shape: f32[8,1,128], index: 6, kind: input, shape index: {}]
  %s7 = inlined_call_operand.hbm [shape: f32[1,128], index: 7, kind: output, shape index: {}]
  %s8 = sld [smem:[#allocation0]]
  $region58: #{tpu_custom_call.1} parent=0
    _
  %s10 = ssub.s32 1, %s8
  %s11 = scalar_select 0, %s10, %s8
  %12 = sst [smem:[#allocation2]] %s5
  $region1: #{tpu_custom_call.1} parent=0
    #allocation3 [shape = 'u8[4096]{0}', space=smem, size = 0x1000, scoped, tag = 'input window, operand 0, single buffered']
    #allocation4 [shape = 's32[1]{0}', space=sflag, size = 0x4, scoped, tag = 'scoped memory for tpu_custom_call.1']
    #allocation5 [shape = 's32[1]{0}', space=sflag, size = 0x4, scoped, tag = 'scoped memory for tpu_custom_call.1']
    #allocation6 [shape = 'u8[512]{0}', space=smem, size = 0x200, scoped, tag = 'input window, operand 1, single buffered']
    #allocation7 [shape = 's32[1]{0}', space=sflag, size = 0x4, scoped, tag = 'scoped memory for tpu_custom_call.1']
    #allocation8 [shape = 'u8[2048]{0}', space=smem, size = 0x800, scoped, tag = 'input window, operand 2, single buffered']
    #allocation9 [shape = 'u8[512]{0}', space=smem, size = 0x200, scoped, tag = 'input window, operand 3, single buffered']
    #allocation10 [shape = 's32[1]{0}', space=sflag, size = 0x4, scoped, tag = 'scoped memory for tpu_custom_call.1']
    #allocation11 [shape = 'u8[2048]{0}', space=smem, size = 0x800, scoped, tag = 'input window, operand 4, single buffered']
    #allocation12 [shape = 'u8[512]{0}', space=vmem, size = 0x400, scoped, tag = 'output window, operand 0, single buffered']
    %13 = vsyncpa [#allocation5], 0
    %14 = vsyncpa [#allocation7], 0
    %15 = vsyncpa [#allocation10], 0
    %16 = vsyncpa [#allocation4], 0
    // Predicated region
    $region2: #{tpu_custom_call.1} parent=1 // pred_check
      _
    $region3: #{tpu_custom_call.1} parent=1 // pred_check_branch
      %18 = sbr.rel (0) target = $region5
    $region4: #{tpu_custom_call.1} parent=1 // pred_region
      %s20 = ssub.s32 128, 128
      %21 = vsyncadd [#allocation5], %s20
      %s23 = sshll.u32 %s0, 4
      %s24 = int_to_ptr.vmem [resolvable:$true] %s23
      %26 = dma.vmem_to_smem %s24, 128, [#allocation3], [#allocation5]
    $region5: #{tpu_custom_call.1} parent=1 // pred_fallthru
      _
    // Predicated region
    $region6: #{tpu_custom_call.1} parent=1 // pred_check
      _
    $region7: #{tpu_custom_call.1} parent=1 // pred_check_branch
      %28 = sbr.rel (0) target = $region9
    $region8: #{tpu_custom_call.1} parent=1 // pred_region
      %s30 = ssub.s32 16, 16
      %31 = vsyncadd [#allocation7], %s30
      %s33 = sshll.u32 %s1, 4
      %s34 = int_to_ptr.vmem [resolvable:$true] %s33
      %36 = dma.vmem_to_smem %s34, 16, [#allocation6], [#allocation7]
    $region9: #{tpu_custom_call.1} parent=1 // pred_fallthru
      _
    // Predicated region
    $region10: #{tpu_custom_call.1} parent=1 // pred_check
      _
    $region11: #{tpu_custom_call.1} parent=1 // pred_check_branch
      %38 = sbr.rel (0) target = $region13
    $region12: #{tpu_custom_call.1} parent=1 // pred_region
      %s40 = ssub.s32 64, 64
      %41 = vsyncadd [#allocation7], %s40
      %s43 = sshll.u32 %s2, 4
      %s44 = int_to_ptr.vmem [resolvable:$true] %s43
      %46 = dma.vmem_to_smem %s44, 64, [#allocation8], [#allocation7]
    $region13: #{tpu_custom_call.1} parent=1 // pred_fallthru
      _
    // Predicated region
    $region14: #{tpu_custom_call.1} parent=1 // pred_check
      _
    $region15: #{tpu_custom_call.1} parent=1 // pred_check_branch
      %48 = sbr.rel (0) target = $region17
    $region16: #{tpu_custom_call.1} parent=1 // pred_region
      %s50 = ssub.s32 16, 16
      %51 = vsyncadd [#allocation10], %s50
      %s53 = sshll.u32 %s3, 4
      %s54 = int_to_ptr.vmem [resolvable:$true] %s53
      %56 = dma.vmem_to_smem %s54, 16, [#allocation9], [#allocation10]
    $region17: #{tpu_custom_call.1} parent=1 // pred_fallthru
      _
    // Predicated region
    $region18: #{tpu_custom_call.1} parent=1 // pred_check
      _
    $region19: #{tpu_custom_call.1} parent=1 // pred_check_branch
      %58 = sbr.rel (0) target = $region21
    $region20: #{tpu_custom_call.1} parent=1 // pred_region
      %s60 = ssub.s32 64, 64
      %61 = vsyncadd [#allocation10], %s60
      %s63 = sshll.u32 %s4, 4
      %s64 = int_to_ptr.vmem [resolvable:$true] %s63
      %66 = dma.vmem_to_smem %s64, 64, [#allocation11], [#allocation10]
    $region21: #{tpu_custom_call.1} parent=1 // pred_fallthru
      _
    // Predicated region
    $region22: #{tpu_custom_call.1} parent=1 // pred_check
      _
    $region23: #{tpu_custom_call.1} parent=1 // pred_check_branch
      %68 = sbr.rel (0) target = $region25
    $region24: #{tpu_custom_call.1} parent=1 // pred_region
      _
    $region25: #{tpu_custom_call.1} parent=1 // pred_fallthru
      _
    // Predicated region
    $region26: #{tpu_custom_call.1} parent=1 // pred_check
      _
    $region27: #{tpu_custom_call.1} parent=1 // pred_check_branch
      %70 = sbr.rel (0) target = $region29
    $region28: #{tpu_custom_call.1} parent=1 // pred_region
      _
    $region29: #{tpu_custom_call.1} parent=1 // pred_fallthru
      _
    // Predicated region
    $region30: #{tpu_custom_call.1} parent=1 // pred_check
      _
    $region31: #{tpu_custom_call.1} parent=1 // pred_check_branch
      %72 = sbr.rel (0) target = $region33
    $region32: #{tpu_custom_call.1} parent=1 // pred_region
      %73 = dma.done [#allocation5], 128
    $region33: #{tpu_custom_call.1} parent=1 // pred_fallthru
      _
    // Predicated region
    $region34: #{tpu_custom_call.1} parent=1 // pred_check
      _
    $region35: #{tpu_custom_call.1} parent=1 // pred_check_branch
      %75 = sbr.rel (0) target = $region37
    $region36: #{tpu_custom_call.1} parent=1 // pred_region
      %76 = dma.done [#allocation7], 16
    $region37: #{tpu_custom_call.1} parent=1 // pred_fallthru
      _
    // Predicated region
    $region38: #{tpu_custom_call.1} parent=1 // pred_check
      _
    $region39: #{tpu_custom_call.1} parent=1 // pred_check_branch
      %78 = sbr.rel (0) target = $region41
    $region40: #{tpu_custom_call.1} parent=1 // pred_region
      %79 = dma.done [#allocation7], 64
    $region41: #{tpu_custom_call.1} parent=1 // pred_fallthru
      _
    // Predicated region
    $region42: #{tpu_custom_call.1} parent=1 // pred_check
      _
    $region43: #{tpu_custom_call.1} parent=1 // pred_check_branch
      %81 = sbr.rel (0) target = $region45
    $region44: #{tpu_custom_call.1} parent=1 // pred_region
      %82 = dma.done [#allocation10], 16
    $region45: #{tpu_custom_call.1} parent=1 // pred_fallthru
      _
    // Predicated region
    $region46: #{tpu_custom_call.1} parent=1 // pred_check
      _
    $region47: #{tpu_custom_call.1} parent=1 // pred_check_branch
      %84 = sbr.rel (0) target = $region49
    $region48: #{tpu_custom_call.1} parent=1 // pred_region
      %85 = dma.done [#allocation10], 64
    $region49: #{tpu_custom_call.1} parent=1 // pred_fallthru
      _
    %86 = sfence
    %v87 = vld [vmem:[%s6] sm:$0x1]
    %s88 = sadd.s32 0, 1
    %s89 = scalar_lea.vmem %s6, %s88
    %v90 = vld [vmem:[%s89] sm:$0x1]
    %s91 = sadd.s32 0, 2
    %s92 = scalar_lea.vmem %s6, %s91
    %v93 = vld [vmem:[%s92] sm:$0x1]
    %s94 = sadd.s32 0, 3
    %s95 = scalar_lea.vmem %s6, %s94
    %v96 = vld [vmem:[%s95] sm:$0x1]
    %s97 = sadd.s32 0, 4
    %s98 = scalar_lea.vmem %s6, %s97
    %v99 = vld [vmem:[%s98] sm:$0x1]
    %s100 = sadd.s32 0, 5
    %s101 = scalar_lea.vmem %s6, %s100
    %v102 = vld [vmem:[%s101] sm:$0x1]
    %s103 = sadd.s32 0, 6
    %s104 = scalar_lea.vmem %s6, %s103
    %v105 = vld [vmem:[%s104] sm:$0x1]
    %s106 = sadd.s32 0, 7
    %s107 = scalar_lea.vmem %s6, %s106
    %v108 = vld [vmem:[%s107] sm:$0x1]
    %s109 = sld [smem:[#allocation3]]
    %v110 = vstv %s109
    %v111 = vmul.f32 %v87, %v110
    %s112 = sld [smem:[#allocation6]]
    %v113 = vstv %s112
    %v114 = vadd.f32 %v111, %v113
    %s115 = sld [smem:[#allocation3 + $0x80]]
    %v116 = vstv %s115
    %v117 = vmul.f32 %v90, %v116
    %v118 = vadd.f32 %v114, %v117
    %s119 = sld [smem:[#allocation3 + $0x100]]
    %v120 = vstv %s119
    %v121 = vmul.f32 %v93, %v120
    %v122 = vadd.f32 %v118, %v121
    %s123 = sld [smem:[#allocation3 + $0x180]]
    %v124 = vstv %s123
    %v125 = vmul.f32 %v96, %v124
    %v126 = vadd.f32 %v122, %v125
    %s127 = sld [smem:[#allocation3 + $0x200]]
    %v128 = vstv %s127
    %v129 = vmul.f32 %v99, %v128
    %v130 = vadd.f32 %v126, %v129
    %s131 = sld [smem:[#allocation3 + $0x280]]
    %v132 = vstv %s131
    %v133 = vmul.f32 %v102, %v132
    %v134 = vadd.f32 %v130, %v133
    %s135 = sld [smem:[#allocation3 + $0x300]]
    %v136 = vstv %s135
    %v137 = vmul.f32 %v105, %v136
    %v138 = vadd.f32 %v134, %v137
    %s139 = sld [smem:[#allocation3 + $0x380]]
    %v140 = vstv %s139
    %v141 = vmul.f32 %v108, %v140
    %v142 = vadd.f32 %v138, %v141
    %v143 = vmax.f32 %v142, 0.0
    %s144 = sld [smem:[#allocation3 + $0x1]]
    %v145 = vstv %s144
    %v146 = vmul.f32 %v87, %v145
    %s147 = sld [smem:[#allocation6 + $0x1]]
    %v148 = vstv %s147
    %v149 = vadd.f32 %v146, %v148
    %s150 = sld [smem:[#allocation3 + $0x81]]
    %v151 = vstv %s150
    %v152 = vmul.f32 %v90, %v151
    %v153 = vadd.f32 %v149, %v152
    %s154 = sld [smem:[#allocation3 + $0x101]]
    %v155 = vstv %s154
    %v156 = vmul.f32 %v93, %v155
    %v157 = vadd.f32 %v153, %v156
    %s158 = sld [smem:[#allocation3 + $0x181]]
    %v159 = vstv %s158
    %v160 = vmul.f32 %v96, %v159
    %v161 = vadd.f32 %v157, %v160
    %s162 = sld [smem:[#allocation3 + $0x201]]
    %v163 = vstv %s162
    %v164 = vmul.f32 %v99, %v163
    %v165 = vadd.f32 %v161, %v164
    %s166 = sld [smem:[#allocation3 + $0x281]]
    %v167 = vstv %s166
    %v168 = vmul.f32 %v102, %v167
    %v169 = vadd.f32 %v165, %v168
    %s170 = sld [smem:[#allocation3 + $0x301]]
    %v171 = vstv %s170
    %v172 = vmul.f32 %v105, %v171
    %v173 = vadd.f32 %v169, %v172
    %s174 = sld [smem:[#allocation3 + $0x381]]
    %v175 = vstv %s174
    %v176 = vmul.f32 %v108, %v175
    %v177 = vadd.f32 %v173, %v176
    %v178 = vmax.f32 %v177, 0.0
    %s179 = sld [smem:[#allocation3 + $0x2]]
    %v180 = vstv %s179
    %v181 = vmul.f32 %v87, %v180
    %s182 = sld [smem:[#allocation6 + $0x2]]
    %v183 = vstv %s182
    %v184 = vadd.f32 %v181, %v183
    %s185 = sld [smem:[#allocation3 + $0x82]]
    %v186 = vstv %s185
    %v187 = vmul.f32 %v90, %v186
    %v188 = vadd.f32 %v184, %v187
    %s189 = sld [smem:[#allocation3 + $0x102]]
    %v190 = vstv %s189
    %v191 = vmul.f32 %v93, %v190
    %v192 = vadd.f32 %v188, %v191
    %s193 = sld [smem:[#allocation3 + $0x182]]
    %v194 = vstv %s193
    %v195 = vmul.f32 %v96, %v194
    %v196 = vadd.f32 %v192, %v195
    %s197 = sld [smem:[#allocation3 + $0x202]]
    %v198 = vstv %s197
    %v199 = vmul.f32 %v99, %v198
    %v200 = vadd.f32 %v196, %v199
    %s201 = sld [smem:[#allocation3 + $0x282]]
    %v202 = vstv %s201
    %v203 = vmul.f32 %v102, %v202
    %v204 = vadd.f32 %v200, %v203
    %s205 = sld [smem:[#allocation3 + $0x302]]
    %v206 = vstv %s205
    %v207 = vmul.f32 %v105, %v206
    %v208 = vadd.f32 %v204, %v207
    %s209 = sld [smem:[#allocation3 + $0x382]]
    %v210 = vstv %s209
    %v211 = vmul.f32 %v108, %v210
    %v212 = vadd.f32 %v208, %v211
    %v213 = vmax.f32 %v212, 0.0
    %s214 = sld [smem:[#allocation3 + $0x3]]
    %v215 = vstv %s214
    %v216 = vmul.f32 %v87, %v215
    %s217 = sld [smem:[#allocation6 + $0x3]]
    %v218 = vstv %s217
    %v219 = vadd.f32 %v216, %v218
    %s220 = sld [smem:[#allocation3 + $0x83]]
    %v221 = vstv %s220
    %v222 = vmul.f32 %v90, %v221
    %v223 = vadd.f32 %v219, %v222
    %s224 = sld [smem:[#allocation3 + $0x103]]
    %v225 = vstv %s224
    %v226 = vmul.f32 %v93, %v225
    %v227 = vadd.f32 %v223, %v226
    %s228 = sld [smem:[#allocation3 + $0x183]]
    %v229 = vstv %s228
    %v230 = vmul.f32 %v96, %v229
    %v231 = vadd.f32 %v227, %v230
    %s232 = sld [smem:[#allocation3 + $0x203]]
    %v233 = vstv %s232
    %v234 = vmul.f32 %v99, %v233
    %v235 = vadd.f32 %v231, %v234
    %s236 = sld [smem:[#allocation3 + $0x283]]
    %v237 = vstv %s236
    %v238 = vmul.f32 %v102, %v237
    %v239 = vadd.f32 %v235, %v238
    %s240 = sld [smem:[#allocation3 + $0x303]]
    %v241 = vstv %s240
    %v242 = vmul.f32 %v105, %v241
    %v243 = vadd.f32 %v239, %v242
    %s244 = sld [smem:[#allocation3 + $0x383]]
    %v245 = vstv %s244
    %v246 = vmul.f32 %v108, %v245
    %v247 = vadd.f32 %v243, %v246
    %v248 = vmax.f32 %v247, 0.0
    %s249 = sld [smem:[#allocation8]]
    %v250 = vstv %s249
    %v251 = vmul.f32 %v143, %v250
    %s252 = sld [smem:[#allocation9]]
    %v253 = vstv %s252
    %v254 = vadd.f32 %v251, %v253
    %s255 = sld [smem:[#allocation8 + $0x80]]
    %v256 = vstv %s255
    %v257 = vmul.f32 %v178, %v256
    %v258 = vadd.f32 %v254, %v257
    %s259 = sld [smem:[#allocation8 + $0x100]]
    %v260 = vstv %s259
    %v261 = vmul.f32 %v213, %v260
    %v262 = vadd.f32 %v258, %v261
    %s263 = sld [smem:[#allocation8 + $0x180]]
    %v264 = vstv %s263
    %v265 = vmul.f32 %v248, %v264
    %v266 = vadd.f32 %v262, %v265
    %v267 = vmax.f32 %v266, 0.0
    %s268 = sld [smem:[#allocation8 + $0x1]]
    %v269 = vstv %s268
    %v270 = vmul.f32 %v143, %v269
    %s271 = sld [smem:[#allocation9 + $0x1]]
    %v272 = vstv %s271
    %v273 = vadd.f32 %v270, %v272
    %s274 = sld [smem:[#allocation8 + $0x81]]
    %v275 = vstv %s274
    %v276 = vmul.f32 %v178, %v275
    %v277 = vadd.f32 %v273, %v276
    %s278 = sld [smem:[#allocation8 + $0x101]]
    %v279 = vstv %s278
    %v280 = vmul.f32 %v213, %v279
    %v281 = vadd.f32 %v277, %v280
    %s282 = sld [smem:[#allocation8 + $0x181]]
    %v283 = vstv %s282
    %v284 = vmul.f32 %v248, %v283
    %v285 = vadd.f32 %v281, %v284
    %v286 = vmax.f32 %v285, 0.0
    %s287 = sld [smem:[#allocation8 + $0x2]]
    %v288 = vstv %s287
    %v289 = vmul.f32 %v143, %v288
    %s290 = sld [smem:[#allocation9 + $0x2]]
    %v291 = vstv %s290
    %v292 = vadd.f32 %v289, %v291
    %s293 = sld [smem:[#allocation8 + $0x82]]
    %v294 = vstv %s293
    %v295 = vmul.f32 %v178, %v294
    %v296 = vadd.f32 %v292, %v295
    %s297 = sld [smem:[#allocation8 + $0x102]]
    %v298 = vstv %s297
    %v299 = vmul.f32 %v213, %v298
    %v300 = vadd.f32 %v296, %v299
    %s301 = sld [smem:[#allocation8 + $0x182]]
    %v302 = vstv %s301
    %v303 = vmul.f32 %v248, %v302
    %v304 = vadd.f32 %v300, %v303
    %v305 = vmax.f32 %v304, 0.0
    %s306 = sld [smem:[#allocation8 + $0x3]]
    %v307 = vstv %s306
    %v308 = vmul.f32 %v143, %v307
    %s309 = sld [smem:[#allocation9 + $0x3]]
    %v310 = vstv %s309
    %v311 = vadd.f32 %v308, %v310
    %s312 = sld [smem:[#allocation8 + $0x83]]
    %v313 = vstv %s312
    %v314 = vmul.f32 %v178, %v313
    %v315 = vadd.f32 %v311, %v314
    %s316 = sld [smem:[#allocation8 + $0x103]]
    %v317 = vstv %s316
    %v318 = vmul.f32 %v213, %v317
    %v319 = vadd.f32 %v315, %v318
    %s320 = sld [smem:[#allocation8 + $0x183]]
    %v321 = vstv %s320
    %v322 = vmul.f32 %v248, %v321
    %v323 = vadd.f32 %v319, %v322
    %v324 = vmax.f32 %v323, 0.0
    %s325 = sld [smem:[#allocation11]]
    %v326 = vstv %s325
    %v327 = vmul.f32 %v267, %v326
    %s328 = sld [smem:[#allocation2]]
    %v329 = vstv %s328
    %v330 = vadd.f32 %v327, %v329
    %s331 = sld [smem:[#allocation11 + $0x80]]
    %v332 = vstv %s331
    %v333 = vmul.f32 %v286, %v332
    %v334 = vadd.f32 %v330, %v333
    %s335 = sld [smem:[#allocation11 + $0x100]]
    %v336 = vstv %s335
    %v337 = vmul.f32 %v305, %v336
    %v338 = vadd.f32 %v334, %v337
    %s339 = sld [smem:[#allocation11 + $0x180]]
    %v340 = vstv %s339
    %v341 = vmul.f32 %v324, %v340
    %v342 = vadd.f32 %v338, %v341
    %v343 = vmul.f32 %v342, 0.5
    %v344 = vtanh.pop %v343
    %v345 = vmul.f32 %v344, 0.5
    %v346 = vadd.f32 %v345, 0.5
    %347 = vst [vmem:[#allocation12] sm:$0x1] %v346
    // Predicated region
    $region50: #{tpu_custom_call.1} parent=1 // pred_check
      _
    $region51: #{tpu_custom_call.1} parent=1 // pred_check_branch
      %349 = sbr.rel (0) target = $region53
    $region52: #{tpu_custom_call.1} parent=1 // pred_region
      %s351 = ssub.s32 16, 16
      %352 = vsyncadd [#allocation4], %s351
      %s354 = sshll.u32 [#allocation12], 4
      %s355 = int_to_ptr.vmem [resolvable:$true] %s354
      %357 = dma.vmem_to_hbm [thread:$0]  %s355, 16, %s7, [#allocation4]
    $region53: #{tpu_custom_call.1} parent=1 // pred_fallthru
      _
    // Predicated region
    $region54: #{tpu_custom_call.1} parent=1 // pred_check
      _
    $region55: #{tpu_custom_call.1} parent=1 // pred_check_branch
      %359 = sbr.rel (0) target = $region57
    $region56: #{tpu_custom_call.1} parent=1 // pred_region
      %360 = dma.done [#allocation4], 16
    $region57: #{tpu_custom_call.1} parent=1 // pred_fallthru
      _
    %361 = vsyncpa [#allocation4], 1
    %362 = vsyncpa [#allocation5], 1
    %363 = vsyncpa [#allocation7], 1
    %364 = vsyncpa [#allocation10], 1

</llo_original>
